<compile_context>
chip_gen: v6e
topology: v6e:2x2x1
jax: 0.10.0
libtpu: 0.0.40
codegen_flags: <defaults>
</compile_context>

<pallas_src>
import functools

import jax
import jax.numpy as jnp
from jax.experimental import pallas as pl
from jax.experimental.pallas import tpu as pltpu

EPS = 1e-5   # nn.BatchNorm1d default eps
K = 3        # kernel_size
POOL = 4     # MaxPool1d(4, 4)


def conv_bn_relu_pool_kernel(x_ref, w_ref, gb_ref, o_ref, sum_ref, ssq_ref, *, nl_total):
    """Grid = (phase, batch-block).  Phase 0: BN-stat partials.  Phase 1: normalize + store.

    x_ref : (1, Cin, L)      one batch element, PyTorch NCL layout (L on lanes)
    w_ref : (K, Cout, Cin)   conv weights, tap-major, bf16 (prepped in the wrapper)
    gb_ref: (Cout, 2)        column 0 = gamma, column 1 = beta
    o_ref : (1, Cout, Lpool) output block, NCL layout
    sum_ref/ssq_ref: (Cout, 1) f32 persistent VMEM scratch (per-channel partials)
    """
    phase = pl.program_id(0)
    n = pl.program_id(1)

    _, cin, length = x_ref.shape
    kk, cout, _ = w_ref.shape
    lout = length - (kk - 1)
    lpool = o_ref.shape[2]

    # Zero the stat accumulators on the very first grid step.
    @pl.when(jnp.logical_and(phase == 0, n == 0))
    def _():
        sum_ref[...] = jnp.zeros_like(sum_ref)
        ssq_ref[...] = jnp.zeros_like(ssq_ref)

    # --- Conv1d (valid, stride 1): K shifted matmuls, bf16 operands, f32 accumulate ---------
    # acc[c_out, l] = sum_k sum_cin W[k, c_out, cin] * x[cin, l + k]
    x = x_ref[0].astype(jnp.bfloat16)                                  # (Cin, L)
    acc = jnp.dot(w_ref[0], x[:, 0:lout], preferred_element_type=jnp.float32)
    for k in range(1, kk):                                             # static unroll, K = 3
        acc = acc + jnp.dot(w_ref[k], x[:, k:k + lout],
                            preferred_element_type=jnp.float32)        # (Cout, Lout) f32
    # NOTE: conv bias intentionally omitted — a per-channel constant added before
    # training-mode BatchNorm cancels exactly.

    @pl.when(phase == 0)
    def _():
        # One sweep over acc: per-channel sum and sum-of-squares (lane-axis reductions).
        sum_ref[...] += jnp.sum(acc, axis=1, keepdims=True)
        ssq_ref[...] += jnp.sum(acc * acc, axis=1, keepdims=True)

    @pl.when(phase == 1)
    def _():
        # BatchNorm1d training mode: biased batch stats over (N, Lout), f32 partials.
        inv_cnt = 1.0 / float(nl_total)
        mean = sum_ref[...] * inv_cnt                                  # (Cout, 1)
        var = ssq_ref[...] * inv_cnt - mean * mean                     # E[x^2] - E[x]^2
        gamma = gb_ref[:, 0:1]                                         # (Cout, 1)
        beta = gb_ref[:, 1:2]                                          # (Cout, 1)
        scale = jax.lax.rsqrt(var + EPS) * gamma
        y = (acc - mean) * scale + beta
        y = jnp.maximum(y, 0.0)                                        # ReLU
        # MaxPool1d(4, 4): split the lane axis into (Lpool, 4) and reduce.
        pooled = jnp.max(y[:, :lpool * POOL].reshape(cout, lpool, POOL), axis=-1)
        o_ref[0, :, :] = pooled.astype(o_ref.dtype)


def conv1x3_forward(x_ncl, weight, bias, gamma, beta):
    """x_ncl: (N, Cin, L) PyTorch layout. Returns (N, Cout, Lpool) in the same layout.

    `bias` is accepted for interface parity with nn.Conv1d but unused: a per-channel
    constant added before training-mode BatchNorm cancels exactly.
    """
    del bias
    N, Cin, L = x_ncl.shape
    Cout = weight.shape[0]
    Lout = L - (K - 1)
    Lpool = Lout // POOL

    # One-time parameter prep (folded into the jitted graph; no in-kernel reshapes).
    w = jnp.transpose(weight, (2, 0, 1)).astype(jnp.bfloat16)   # (K, Cout, Cin)
    gb = jnp.stack([gamma, beta], axis=1).astype(jnp.float32)   # (Cout, 2)

    out = pl.pallas_call(
        functools.partial(conv_bn_relu_pool_kernel, nl_total=N * Lout),
        out_shape=jax.ShapeDtypeStruct((N, Cout, Lpool), x_ncl.dtype),
        grid=(2, N),  # (phase, batch block); default double-buffering pipelines the x stream
        in_specs=[
            pl.BlockSpec((1, Cin, L), lambda p, n: (n, 0, 0)),     # x, streamed per batch elem
            pl.BlockSpec((K, Cout, Cin), lambda p, n: (0, 0, 0)),  # weights, resident
            pl.BlockSpec((Cout, 2), lambda p, n: (0, 0)),          # gamma/beta, resident
        ],
        # During phase 0 every step maps to block 0 and the kernel never writes it, so no
        # garbage writeback is ever flushed; phase 1 writes each block exactly once.
        out_specs=pl.BlockSpec((1, Cout, Lpool), lambda p, n: (n * p, 0, 0)),
        scratch_shapes=[
            pltpu.VMEM((Cout, 1), jnp.float32),   # per-channel sum partials
            pltpu.VMEM((Cout, 1), jnp.float32),   # per-channel sum-of-squares partials
        ],
        compiler_params=pltpu.CompilerParams(
            # Both axes sequential: the phase axis is a reduction and both phases share the
            # stat scratch.  TODO(synk): per-core partials would allow "parallel" on v7x.
            dimension_semantics=("arbitrary", "arbitrary")),
    )(x_ncl, w, gb)
    return out


def reference_forward(x_ncl, weight, bias, gamma, beta):
    """Pure-JAX f32 reference matching PyTorch Conv1x3.forward in training mode."""
    out = jax.lax.conv_general_dilated(
        x_ncl, weight, window_strides=(1,), padding='VALID',
        dimension_numbers=('NCH', 'OIH', 'NCH'))
    out = out + bias[None, :, None]
    mean = jnp.mean(out, axis=(0, 2), keepdims=True)
    var = jnp.mean((out - mean) ** 2, axis=(0, 2), keepdims=True)
    out = (out - mean) * jax.lax.rsqrt(var + EPS)
    out = out * gamma[None, :, None] + beta[None, :, None]
    out = jnp.maximum(out, 0.0)
    N, C, Lc = out.shape
    Lp = Lc // POOL
    out = out[:, :, :Lp * POOL].reshape(N, C, Lp, POOL)
    return jnp.max(out, axis=-1)


if __name__ == "__main__":
    # Small shapes consistent with the module: N=2, Cin=4, Cout=8, L=34
    # -> conv length 32 -> pooled length 8.
    N, Cin, Cout, L = 2, 4, 8, 34

    key = jax.random.PRNGKey(0)
    kx, kw, kb = jax.random.split(key, 3)

    x = jax.random.normal(kx, (N, Cin, L), dtype=jnp.float32)

    # Deterministic init mimicking PyTorch Conv1d default (uniform +-1/sqrt(Cin*K)).
    bound = 1.0 / (Cin * K) ** 0.5
    weight = jax.random.uniform(kw, (Cout, Cin, K), jnp.float32, -bound, bound)
    bias = jax.random.uniform(kb, (Cout,), jnp.float32, -bound, bound)
    gamma = jnp.ones((Cout,), jnp.float32)   # BatchNorm1d default weight
    beta = jnp.zeros((Cout,), jnp.float32)   # BatchNorm1d default bias

    fwd = jax.jit(conv1x3_forward)           # folds the (tiny) weight/gamma-beta prep ops in
    out = jax.block_until_ready(fwd(x, weight, bias, gamma, beta))

    ref = jax.block_until_ready(reference_forward(x, weight, bias, gamma, beta))
    assert out.shape == (N, Cout, (L - 2) // POOL), out.shape
    # bf16 MXU operands (f32 accumulate) vs. an f32 reference: agreement is ~1e-2 after the
    # BN renormalization, so use a 2e-2 tolerance.
    max_err = float(jnp.max(jnp.abs(out - ref)))
    assert jnp.allclose(out, ref, atol=2e-2, rtol=2e-2), max_err

    print("KERNEL_OK")
</pallas_src>

<mosaic_0001>
module attributes {stable_mosaic.version = 11 : i64} {
  func.func @conv_bn_relu_pool_kernel(%arg0: i32, %arg1: i32, %arg2: memref<1x4x34xf32, #tpu.memory_space<vmem>>, %arg3: memref<3x8x4xbf16, #tpu.memory_space<vmem>>, %arg4: memref<8x2xf32, #tpu.memory_space<vmem>>, %arg5: memref<1x8x8xf32, #tpu.memory_space<vmem>>, %arg6: memref<8x1xf32, #tpu.memory_space<vmem>>, %arg7: memref<8x1xf32, #tpu.memory_space<vmem>>) attributes {dimension_semantics = [#tpu.dimension_semantics<arbitrary>, #tpu.dimension_semantics<arbitrary>], iteration_bounds = array<i64: 2, 2>, scalar_prefetch = 0 : i64, scratch_operands = 2 : i64, tpu.core_type = #tpu.core_type<tc>, window_params = [{transform_indices = @transform_0, window_bounds = array<i64: 1, 4, 34>}, {pipeline_mode = #tpu.pipeline_mode<synchronous>, transform_indices = @transform_1, window_bounds = array<i64: 3, 8, 4>}, {pipeline_mode = #tpu.pipeline_mode<synchronous>, transform_indices = @transform_2, window_bounds = array<i64: 8, 2>}, {transform_indices = @transform_3, window_bounds = array<i64: 1, 8, 8>}]} {
    %c0_i32 = arith.constant 0 : i32
    %0 = arith.cmpi eq, %arg0, %c0_i32 : i32
    %c0_i32_0 = arith.constant 0 : i32
    %1 = arith.cmpi eq, %arg1, %c0_i32_0 : i32
    %2 = arith.andi %0, %1 : i1
    %3 = arith.extui %2 : i1 to i32
    %c0_i32_1 = arith.constant 0 : i32
    %4 = arith.cmpi ne, %3, %c0_i32_1 : i32
    scf.if %4 {
      %cst_16 = arith.constant 0.000000e+00 : f32
      %28 = vector.broadcast %cst_16 : f32 to vector<8x1xf32>
      %c0_17 = arith.constant 0 : index
      %c0_18 = arith.constant 0 : index
      %29 = vector.load %arg6[%c0_17, %c0_18] : memref<8x1xf32, #tpu.memory_space<vmem>>, vector<8x1xf32>
      tpu.vector_store %arg6[%c0_17, %c0_18], %28 {strides = array<i32>} : memref<8x1xf32, #tpu.memory_space<vmem>>, vector<8x1xf32>,
      %cst_19 = arith.constant 0.000000e+00 : f32
      %30 = vector.broadcast %cst_19 : f32 to vector<8x1xf32>
      %c0_20 = arith.constant 0 : index
      %c0_21 = arith.constant 0 : index
      %31 = vector.load %arg7[%c0_20, %c0_21] : memref<8x1xf32, #tpu.memory_space<vmem>>, vector<8x1xf32>
      tpu.vector_store %arg7[%c0_20, %c0_21], %30 {strides = array<i32>} : memref<8x1xf32, #tpu.memory_space<vmem>>, vector<8x1xf32>,
    } else {
    }
    %c0 = arith.constant 0 : index
    %c0_2 = arith.constant 0 : index
    %c0_3 = arith.constant 0 : index
    %5 = vector.load %arg2[%c0, %c0_2, %c0_3] : memref<1x4x34xf32, #tpu.memory_space<vmem>>, vector<1x4x34xf32>
    %6 = vector.shape_cast %5 : vector<1x4x34xf32> to vector<4x34xf32>
    %7 = arith.truncf %6 : vector<4x34xf32> to vector<4x34xbf16>
    %c0_4 = arith.constant 0 : index
    %c0_5 = arith.constant 0 : index
    %c0_6 = arith.constant 0 : index
    %8 = vector.load %arg3[%c0_4, %c0_5, %c0_6] : memref<3x8x4xbf16, #tpu.memory_space<vmem>>, vector<1x8x4xbf16>
    %9 = vector.shape_cast %8 : vector<1x8x4xbf16> to vector<8x4xbf16>
    %10 = vector.extract_strided_slice %7 {offsets = [0, 0], sizes = [4, 32], strides = [1, 1]} : vector<4x34xbf16> to vector<4x32xbf16>
    %cst = arith.constant dense<0.000000e+00> : vector<8x32xf32>
    %11 = tpu.matmul %9, %10, %cst {dimension_numbers = #tpu.dot_dimension_numbers<[1], [0], [0], [1], [0, 0, 1, 1], [], []>} : vector<8x4xbf16>, vector<4x32xbf16>, vector<8x32xf32> -> vector<8x32xf32>
    %c1 = arith.constant 1 : index
    %c0_7 = arith.constant 0 : index
    %c0_8 = arith.constant 0 : index
    %12 = vector.load %arg3[%c1, %c0_7, %c0_8] : memref<3x8x4xbf16, #tpu.memory_space<vmem>>, vector<1x8x4xbf16>
    %13 = vector.shape_cast %12 : vector<1x8x4xbf16> to vector<8x4xbf16>
    %14 = vector.extract_strided_slice %7 {offsets = [0, 1], sizes = [4, 32], strides = [1, 1]} : vector<4x34xbf16> to vector<4x32xbf16>
    %cst_9 = arith.constant dense<0.000000e+00> : vector<8x32xf32>
    %15 = tpu.matmul %13, %14, %cst_9 {dimension_numbers = #tpu.dot_dimension_numbers<[1], [0], [0], [1], [0, 0, 1, 1], [], []>} : vector<8x4xbf16>, vector<4x32xbf16>, vector<8x32xf32> -> vector<8x32xf32>
    %16 = arith.addf %11, %15 : vector<8x32xf32>
    %c2 = arith.constant 2 : index
    %c0_10 = arith.constant 0 : index
    %c0_11 = arith.constant 0 : index
    %17 = vector.load %arg3[%c2, %c0_10, %c0_11] : memref<3x8x4xbf16, #tpu.memory_space<vmem>>, vector<1x8x4xbf16>
    %18 = vector.shape_cast %17 : vector<1x8x4xbf16> to vector<8x4xbf16>
    %19 = vector.extract_strided_slice %7 {offsets = [0, 2], sizes = [4, 32], strides = [1, 1]} : vector<4x34xbf16> to vector<4x32xbf16>
    %cst_12 = arith.constant dense<0.000000e+00> : vector<8x32xf32>
    %20 = tpu.matmul %18, %19, %cst_12 {dimension_numbers = #tpu.dot_dimension_numbers<[1], [0], [0], [1], [0, 0, 1, 1], [], []>} : vector<8x4xbf16>, vector<4x32xbf16>, vector<8x32xf32> -> vector<8x32xf32>
    %21 = arith.addf %16, %20 : vector<8x32xf32>
    %c0_i32_13 = arith.constant 0 : i32
    %22 = arith.cmpi eq, %arg0, %c0_i32_13 : i32
    %23 = arith.extui %22 : i1 to i32
    %c0_i32_14 = arith.constant 0 : i32
    %24 = arith.cmpi ne, %23, %c0_i32_14 : i32
    scf.if %24 {
      %c0_16 = arith.constant 0 : index
      %c0_17 = arith.constant 0 : index
      %28 = vector.load %arg6[%c0_16, %c0_17] : memref<8x1xf32, #tpu.memory_space<vmem>>, vector<8x1xf32>
      %cst_18 = arith.constant dense<0.000000e+00> : vector<8xf32>
      %29 = vector.multi_reduction <add>, %21, %cst_18 [1] : vector<8x32xf32> to vector<8xf32>
      %30 = vector.shape_cast %29 : vector<8xf32> to vector<8x1xf32>
      %31 = arith.addf %28, %30 : vector<8x1xf32>
      %c0_19 = arith.constant 0 : index
      %c0_20 = arith.constant 0 : index
      %32 = vector.load %arg6[%c0_19, %c0_20] : memref<8x1xf32, #tpu.memory_space<vmem>>, vector<8x1xf32>
      tpu.vector_store %arg6[%c0_19, %c0_20], %31 {strides = array<i32>} : memref<8x1xf32, #tpu.memory_space<vmem>>, vector<8x1xf32>,
      %c0_21 = arith.constant 0 : index
      %c0_22 = arith.constant 0 : index
      %33 = vector.load %arg7[%c0_21, %c0_22] : memref<8x1xf32, #tpu.memory_space<vmem>>, vector<8x1xf32>
      %34 = arith.mulf %21, %21 : vector<8x32xf32>
      %cst_23 = arith.constant dense<0.000000e+00> : vector<8xf32>
      %35 = vector.multi_reduction <add>, %34, %cst_23 [1] : vector<8x32xf32> to vector<8xf32>
      %36 = vector.shape_cast %35 : vector<8xf32> to vector<8x1xf32>
      %37 = arith.addf %33, %36 : vector<8x1xf32>
      %c0_24 = arith.constant 0 : index
      %c0_25 = arith.constant 0 : index
      %38 = vector.load %arg7[%c0_24, %c0_25] : memref<8x1xf32, #tpu.memory_space<vmem>>, vector<8x1xf32>
      tpu.vector_store %arg7[%c0_24, %c0_25], %37 {strides = array<i32>} : memref<8x1xf32, #tpu.memory_space<vmem>>, vector<8x1xf32>,
    } else {
    }
    %c1_i32 = arith.constant 1 : i32
    %25 = arith.cmpi eq, %arg0, %c1_i32 : i32
    %26 = arith.extui %25 : i1 to i32
    %c0_i32_15 = arith.constant 0 : i32
    %27 = arith.cmpi ne, %26, %c0_i32_15 : i32
    scf.if %27 {
      %c0_16 = arith.constant 0 : index
      %c0_17 = arith.constant 0 : index
      %28 = vector.load %arg6[%c0_16, %c0_17] : memref<8x1xf32, #tpu.memory_space<vmem>>, vector<8x1xf32>
      %cst_18 = arith.constant 1.562500e-02 : f32
      %29 = vector.broadcast %cst_18 : f32 to vector<8x1xf32>
      %30 = arith.mulf %28, %29 : vector<8x1xf32>
      %c0_19 = arith.constant 0 : index
      %c0_20 = arith.constant 0 : index
      %31 = vector.load %arg7[%c0_19, %c0_20] : memref<8x1xf32, #tpu.memory_space<vmem>>, vector<8x1xf32>
      %cst_21 = arith.constant 1.562500e-02 : f32
      %32 = vector.broadcast %cst_21 : f32 to vector<8x1xf32>
      %33 = arith.mulf %31, %32 : vector<8x1xf32>
      %34 = arith.mulf %30, %30 : vector<8x1xf32>
      %35 = arith.subf %33, %34 : vector<8x1xf32>
      %c0_22 = arith.constant 0 : index
      %c0_23 = arith.constant 0 : index
      %36 = vector.load %arg4[%c0_22, %c0_23] : memref<8x2xf32, #tpu.memory_space<vmem>>, vector<8x1xf32>
      %c0_24 = arith.constant 0 : index
      %c1_25 = arith.constant 1 : index
      %37 = vector.load %arg4[%c0_24, %c1_25] : memref<8x2xf32, #tpu.memory_space<vmem>>, vector<8x1xf32>
      %cst_26 = arith.constant 9.99999974E-6 : f32
      %38 = vector.broadcast %cst_26 : f32 to vector<8x1xf32>
      %39 = arith.addf %35, %38 : vector<8x1xf32>
      %40 = math.rsqrt %39 : vector<8x1xf32>
      %41 = arith.mulf %40, %36 : vector<8x1xf32>
      %42 = vector.broadcast %30 : vector<8x1xf32> to vector<8x32xf32>
      %43 = arith.subf %21, %42 : vector<8x32xf32>
      %44 = vector.broadcast %41 : vector<8x1xf32> to vector<8x32xf32>
      %45 = arith.mulf %43, %44 : vector<8x32xf32>
      %46 = vector.broadcast %37 : vector<8x1xf32> to vector<8x32xf32>
      %47 = arith.addf %45, %46 : vector<8x32xf32>
      %cst_27 = arith.constant 0.000000e+00 : f32
      %48 = vector.broadcast %cst_27 : f32 to vector<8x32xf32>
      %49 = arith.maximumf %47, %48 : vector<8x32xf32>
      %50 = vector.shape_cast %49 : vector<8x32xf32> to vector<8x8x4xf32>
      %cst_28 = arith.constant dense<0xFF800000> : vector<8x8xf32>
      %51 = vector.multi_reduction <maximumf>, %50, %cst_28 [2] : vector<8x8x4xf32> to vector<8x8xf32>
      %c0_29 = arith.constant 0 : index
      %c0_30 = arith.constant 0 : index
      %c0_31 = arith.constant 0 : index
      %52 = vector.load %arg5[%c0_29, %c0_30, %c0_31] : memref<1x8x8xf32, #tpu.memory_space<vmem>>, vector<1x8x8xf32>
      %53 = vector.shape_cast %52 : vector<1x8x8xf32> to vector<8x8xf32>
      %54 = vector.shape_cast %51 : vector<8x8xf32> to vector<1x8x8xf32>
      tpu.vector_store %arg5[%c0_29, %c0_30, %c0_31], %54 {strides = array<i32>} : memref<1x8x8xf32, #tpu.memory_space<vmem>>, vector<1x8x8xf32>,
    } else {
    }
    return
  }
  func.func @transform_0(%arg0: i32, %arg1: i32) -> (i32, i32, i32) {
    %c0_i32 = arith.constant 0 : i32
    %c0_i32_0 = arith.constant 0 : i32
    %c0_i32_1 = arith.constant 0 : i32
    return %arg1, %c0_i32, %c0_i32_0 : i32, i32, i32
  }
  func.func @transform_1(%arg0: i32, %arg1: i32) -> (i32, i32, i32) {
    %c0_i32 = arith.constant 0 : i32
    %c0_i32_0 = arith.constant 0 : i32
    %c0_i32_1 = arith.constant 0 : i32
    %c0_i32_2 = arith.constant 0 : i32
    return %c0_i32, %c0_i32_0, %c0_i32_1 : i32, i32, i32
  }
  func.func @transform_2(%arg0: i32, %arg1: i32) -> (i32, i32) {
    %c0_i32 = arith.constant 0 : i32
    %c0_i32_0 = arith.constant 0 : i32
    %c0_i32_1 = arith.constant 0 : i32
    return %c0_i32, %c0_i32_0 : i32, i32
  }
  func.func @transform_3(%arg0: i32, %arg1: i32) -> (i32, i32, i32) {
    %0 = arith.muli %arg1, %arg0 : i32
    %c0_i32 = arith.constant 0 : i32
    %c0_i32_0 = arith.constant 0 : i32
    %c0_i32_1 = arith.constant 0 : i32
    return %0, %c0_i32, %c0_i32_0 : i32, i32, i32
  }
}

</mosaic_0001>

<llo_original>
// kernel: conv1x3_forward.1
$region0: #{conv1x3_forward.1}
  #allocation0 [shape = 'u32[]', space=smem, size = 0x4, offset = 0x4, fixed_abs, tag = 'smem constant byte address 0x4 - core index']
  #allocation1 [shape = 'u32[144,128]{1,0:T(1,128)}', space=vmem, size = 0x12000, scoped, tag = 'internal scratch']
  #allocation2 [shape = 'f32[8,1]{1,0:T(8,128)}', space=vmem, size = 0x1000, scoped, tag = 'scratch operand']
  #allocation3 [shape = 'f32[8,1]{1,0:T(8,128)}', space=vmem, size = 0x1000, scoped, tag = 'scratch operand']
  %s0 = inlined_call_operand.vmem [shape: f32[2,4,34], index: 0, kind: input, shape index: {}]
  %s1 = inlined_call_operand.vmem [shape: bf16[3,8,4], index: 1, kind: input, shape index: {}]
  %s2 = inlined_call_operand.vmem [shape: f32[8,2], index: 2, kind: input, shape index: {}]
  %s3 = inlined_call_operand.hbm [shape: f32[2,8,8], index: 3, kind: output, shape index: {}]
  %s4 = sld [smem:[#allocation0]]
  $region57: #{conv1x3_forward.1} parent=0
    _
  %s6 = ssub.s32 1, %s4
  %s7 = scalar_select 0, %s6, %s4
  $region1: #{conv1x3_forward.1} parent=0
    #allocation4 [shape = 'u8[8192]{0}', space=vmem, size = 0x2000, scoped, tag = 'output window, operand 0']
    #allocation5 [shape = 's32[2]{0}', space=sflag, size = 0x8, scoped, tag = 'scoped memory for conv1x3_forward.1']
    %8 = vsyncpa [#allocation5], 0
    %s9 = scalar_lea.sflag [#allocation5], 1
    %10 = vsyncpa %s9, 0
    loop: start=0, step=1, limit=6
    $region2: #{conv1x3_forward.1} parent=1 // loop_pre_header
      _
    $region3: #{conv1x3_forward.1} parent=1 // loop_header
      %s12 = sphi 0, %s16
      %p13 = scmp.ge.s32.totalorder %s12, 6
      %s19 = sphi 0, %s31
      %s20 = sphi 0, %s27
      %s21 = sphi 0, %s19
      %s22 = sphi 0, %s20
      %s23 = sphi 0, %s21
      %s24 = sphi 0, %s22
      %s34 = sphi 0, %s36
      %s37 = sphi 0, %s34
      %s38 = sphi 0, %s37
      %s54 = sphi 0, %s38
      %s58 = sphi 0, %s58
      %s60 = sphi 0, %s58
      %s61 = sphi 0, %s60
      %s75 = sphi 0, %s61
      %s79 = sphi 0, %s79
      %s81 = sphi 0, %s79
      %s82 = sphi 0, %s81
      %s96 = sphi 0, %s82
      %s104 = sphi 0, %s106
      %s107 = sphi 0, %s104
      %s108 = sphi 0, %s107
      %s124 = sphi 0, %s108
    $region4: #{conv1x3_forward.1} parent=1 // loop_header_branch
      %15 = sbr.rel (%p13) target = $region8
    $region5: #{conv1x3_forward.1} parent=1 // loop_body
      %s17 = ssub.s32 %s12, 1
      %s18 = ssub.s32 %s12, 2
      %s25 = sadd.s32 1, %s20
      %p26 = scmp.ge.s32.totalorder %s25, 2
      %s27 = scalar_select %p26, 0, %s25
      %s28 = sadd.s32 1, %s19
      %s29 = scalar_select %p26, %s28, %s19
      %p30 = scmp.ge.s32.totalorder %s29, 2
      %s31 = scalar_select %p30, 0, %s29
      %s32 = ssub.s32 %s20, %s27
      %p33 = scmp.eq.s32.totalorder %s32, 0
      %s35 = sadd.s32 %s34, 1
      %s36 = scalar_select %p33, %s34, %s35
      %p39 = pneg %p33
      %p40 = scmp.eq.s32.totalorder %s12, 3
      %p41 = por %p39, %p40
      %p42 = scmp.ne.s32.totalorder %s34, %s37
      %p43 = scmp.eq.s32.totalorder %s12, 0
      %p44 = por %p42, %p43
      %p45 = scmp.ne.s32.totalorder %s34, %s37
      %p46 = scmp.eq.s32.totalorder %s17, 3
      %p47 = por %p45, %p46
      %p48 = scmp.ne.s32.totalorder %s37, %s38
      %p49 = scmp.eq.s32.totalorder %s17, 0
      %p50 = por %p48, %p49
      %p51 = scmp.ne.s32.totalorder %s37, %s38
      %p52 = scmp.eq.s32.totalorder %s18, 3
      %p53 = por %p51, %p52
      %p55 = scmp.ne.s32.totalorder %s38, %s54
      %p56 = scmp.eq.s32.totalorder %s18, 0
      %p57 = por %p55, %p56
      %s59 = sadd.s32 %s58, 1
      %p62 = scmp.eq.s32.totalorder %s12, 3
      %p63 = scmp.ne.s32.totalorder %s58, %s60
      %p64 = scmp.eq.s32.totalorder %s12, 0
      %p65 = por %p63, %p64
      %p66 = scmp.ne.s32.totalorder %s58, %s60
      %p67 = scmp.eq.s32.totalorder %s17, 3
      %p68 = por %p66, %p67
      %p69 = scmp.ne.s32.totalorder %s60, %s61
      %p70 = scmp.eq.s32.totalorder %s17, 0
      %p71 = por %p69, %p70
      %p72 = scmp.ne.s32.totalorder %s60, %s61
      %p73 = scmp.eq.s32.totalorder %s18, 3
      %p74 = por %p72, %p73
      %p76 = scmp.ne.s32.totalorder %s61, %s75
      %p77 = scmp.eq.s32.totalorder %s18, 0
      %p78 = por %p76, %p77
      %s80 = sadd.s32 %s79, 1
      %p83 = scmp.eq.s32.totalorder %s12, 3
      %p84 = scmp.ne.s32.totalorder %s79, %s81
      %p85 = scmp.eq.s32.totalorder %s12, 0
      %p86 = por %p84, %p85
      %p87 = scmp.ne.s32.totalorder %s79, %s81
      %p88 = scmp.eq.s32.totalorder %s17, 3
      %p89 = por %p87, %p88
      %p90 = scmp.ne.s32.totalorder %s81, %s82
      %p91 = scmp.eq.s32.totalorder %s17, 0
      %p92 = por %p90, %p91
      %p93 = scmp.ne.s32.totalorder %s81, %s82
      %p94 = scmp.eq.s32.totalorder %s18, 3
      %p95 = por %p93, %p94
      %p97 = scmp.ne.s32.totalorder %s82, %s96
      %p98 = scmp.eq.s32.totalorder %s18, 0
      %p99 = por %p97, %p98
      %s100 = smul.u32 %s20, %s19
      %s101 = smul.u32 %s27, %s31
      %s102 = ssub.s32 %s100, %s101
      %p103 = scmp.eq.s32.totalorder %s102, 0
      %s105 = sadd.s32 %s104, 1
      %s106 = scalar_select %p103, %s104, %s105
      %p109 = pneg %p103
      %p110 = scmp.eq.s32.totalorder %s12, 3
      %p111 = por %p109, %p110
      %p112 = scmp.ne.s32.totalorder %s104, %s107
      %p113 = scmp.eq.s32.totalorder %s12, 0
      %p114 = por %p112, %p113
      %p115 = scmp.ne.s32.totalorder %s104, %s107
      %p116 = scmp.eq.s32.totalorder %s17, 3
      %p117 = por %p115, %p116
      %p118 = scmp.ne.s32.totalorder %s107, %s108
      %p119 = scmp.eq.s32.totalorder %s17, 0
      %p120 = por %p118, %p119
      %p121 = scmp.ne.s32.totalorder %s107, %s108
      %p122 = scmp.eq.s32.totalorder %s18, 3
      %p123 = por %p121, %p122
      %p125 = scmp.ne.s32.totalorder %s108, %s124
      %p126 = scmp.eq.s32.totalorder %s18, 0
      %p127 = por %p125, %p126
      %p128 = scmp.le.s32.totalorder 1, %s12
      %p129 = scmp.lt.s32.totalorder %s12, 5
      %p130 = pnand %p128, %p129
      %p131 = pneg %p130
      // Predicated region
      $region9: #{conv1x3_forward.1} parent=5 // pred_check
        _
      $region10: #{conv1x3_forward.1} parent=5 // pred_check_branch
        %133 = sbr.rel (%p130) target = $region12
      $region11: #{conv1x3_forward.1} parent=5 // pred_region
        %s134 = ssub.s32 %s12, 1
        // Predicated region
        $region13: #{conv1x3_forward.1} parent=11 // pred_check
          %p135 = pneg %p71
        $region14: #{conv1x3_forward.1} parent=11 // pred_check_branch
          %137 = sbr.rel (%p135) target = $region16
        $region15: #{conv1x3_forward.1} parent=11 // pred_region
          _
        $region16: #{conv1x3_forward.1} parent=11 // pred_fallthru
          _
        // Predicated region
        $region17: #{conv1x3_forward.1} parent=11 // pred_check
          %p138 = pneg %p92
        $region18: #{conv1x3_forward.1} parent=11 // pred_check_branch
          %140 = sbr.rel (%p138) target = $region20
        $region19: #{conv1x3_forward.1} parent=11 // pred_region
          _
        $region20: #{conv1x3_forward.1} parent=11 // pred_fallthru
          _
      $region12: #{conv1x3_forward.1} parent=5 // pred_fallthru
        _
      %p141 = scmp.lt.s32.totalorder %s12, 4
      // Predicated region
      $region21: #{conv1x3_forward.1} parent=5 // pred_check
        %p142 = pneg %p141
      $region22: #{conv1x3_forward.1} parent=5 // pred_check_branch
        %144 = sbr.rel (%p142) target = $region24
      $region23: #{conv1x3_forward.1} parent=5 // pred_region
        // Predicated region
        $region25: #{conv1x3_forward.1} parent=23 // pred_check
          %p145 = pneg %p44
        $region26: #{conv1x3_forward.1} parent=23 // pred_check_branch
          %147 = sbr.rel (%p145) target = $region28
        $region27: #{conv1x3_forward.1} parent=23 // pred_region
          %p148 = scmp.lt.s32.totalorder %s20, 1
          %s149 = scalar_select %p148, %s20, 1
          %s150 = smul.addr %s149, 4
          %s151 = scalar_lea.vmem %s0, %s150
        $region28: #{conv1x3_forward.1} parent=23 // pred_fallthru
          _
      $region24: #{conv1x3_forward.1} parent=5 // pred_fallthru
        _
      %p152 = scmp.le.s32.totalorder 1, %s12
      %p153 = scmp.lt.s32.totalorder %s12, 5
      %p154 = pnand %p152, %p153
      %p155 = pneg %p154
      // Predicated region
      $region29: #{conv1x3_forward.1} parent=5 // pred_check
        _
      $region30: #{conv1x3_forward.1} parent=5 // pred_check_branch
        %157 = sbr.rel (%p154) target = $region32
      $region31: #{conv1x3_forward.1} parent=5 // pred_region
        %s158 = ssub.s32 %s12, 1
        %p159 = scmp.lt.s32.totalorder %s22, 1
        %s160 = scalar_select %p159, %s22, 1
        %s161 = smul.addr %s160, 4
        %s162 = scalar_lea.vmem %s0, %s161
        %p163 = pneg %p50
        %p164 = pneg %p47
        %p165 = pneg %p71
        %p166 = pneg %p68
        %p167 = pneg %p92
        %p168 = pneg %p89
        %p169 = pneg %p120
        %p170 = pneg %p117
        %s171 = sand.u32 %s107, 1
        %s172 = scalar_lea.sflag [#allocation5], %s171
        %s173 = sand.u32 %s107, 1
        %s174 = smul.addr %s173, 8
        %s175 = scalar_lea.vmem [#allocation4], %s174
        %p176 = scmp.lt.s32.totalorder %s22, 1
        %s177 = scalar_select %p176, %s22, 1
        %s178 = smul.addr %s177, 4
        %s179 = scalar_lea.vmem %s0, %s178
        %s180 = smul.u32 %s22, %s21
        %p182 = scmp.eq.s32.totalorder %s21, 0
        %p183 = scmp.eq.s32.totalorder %s22, 0
        %p184 = pnand %p182, %p183
        %p185 = pneg %p184
        // Predicated region
        $region33: #{conv1x3_forward.1} parent=31 // pred_check
          _
        $region34: #{conv1x3_forward.1} parent=31 // pred_check_branch
          %187 = sbr.rel (%p184) target = $region36
        $region35: #{conv1x3_forward.1} parent=31 // pred_region
          %vm188 = vcmask 7168
          %189 = vst.msk [vmem:[#allocation2] sm:$0xff] %vm188, 0.0
          %190 = vst.msk [vmem:[#allocation3] sm:$0xff] %vm188, 0.0
        $region36: #{conv1x3_forward.1} parent=31 // pred_fallthru
          _
        %v191 = vld [vmem:[%s179] sm:$0xf]
        %v192 = vpack.c.bf16 %v191, %v191
        %v193 = vld [vmem:[%s1] sm:$0xf]
        %s194 = scalar_lea.vmem %s1, 4
        %v195 = vld [vmem:[%s194] sm:$0xf]
        %197 = vrot.lane.b32.xlu0 %v192, 127
        %v198 = vpop.permute.xlu0 %197
        %vm199 = vcmask 31744
        %v201 = vsel %vm199, %v195, 0
        %vm203 = vcmask 1041408
        %v205 = vsel %vm203, %v198, 0
        %207 = vmatprep.subr.bf16.mxu0 0
        %208 = vmatpush1.bf16.msra.mxu0 0
        %209 = vmatprep.subr.bf16.mxu0 0
        %210 = vmatpush1.bf16.msra.mxu0 0
        %211 = vmatprep.subr.bf16.mxu0 0
        %212 = vmatpush1.bf16.msra.mxu0 0
        %213 = vmatprep.subr.bf16.mxu0 0
        %214 = vmatpush1.bf16.msra.mxu0 0
        %215 = vmatprep.subr.bf16.mxu0 0
        %216 = vmatpush1.bf16.msra.mxu0 0
        %217 = vmatprep.subr.bf16.mxu0 0
        %218 = vmatpush1.bf16.msra.mxu0 0
        %219 = vmatprep.subr.bf16.mxu0 0
        %220 = vmatpush1.bf16.msra.mxu0 0
        %221 = vmatprep.subr.bf16.mxu0 0
        %222 = vmatpush1.bf16.msra.mxu0 %v205
        %223 = vmatprep.subr.bf16.mxu0 0
        %224 = vmatpush2.bf16.msra.mxu0 0
        %225 = vmatprep.subr.bf16.mxu0 0
        %226 = vmatpush2.bf16.msra.mxu0 0
        %227 = vmatprep.subr.bf16.mxu0 0
        %228 = vmatpush2.bf16.msra.mxu0 0
        %229 = vmatprep.subr.bf16.mxu0 0
        %230 = vmatpush2.bf16.msra.mxu0 0
        %231 = vmatprep.subr.bf16.mxu0 0
        %232 = vmatpush2.bf16.msra.mxu0 0
        %233 = vmatprep.subr.bf16.mxu0 0
        %234 = vmatpush2.bf16.msra.mxu0 0
        %235 = vmatprep.subr.bf16.mxu0 0
        %236 = vmatpush2.bf16.msra.mxu0 0
        %237 = vmatprep.subr.bf16.mxu0 0
        %238 = vmatpush2.bf16.msra.mxu0 0
        %239 = vmatprep.mubr.bf16.mxu0 0
        %240 = vmatmul.mubr.bf16.gmra.mxu0 %v201
        %v241 = vpop.f32.mrf.mxu0
        %v242 = vadd.f32 0.0, %v241
        %v243 = vpop.f32.mrf.mxu0
        %v244 = vpop.f32.mrf.mxu0
        %v245 = vpop.f32.mrf.mxu0
        %246 = vdwg.mxu0
        %v248 = vsel %vm199, %v193, 0
        %v251 = vsel %vm203, %v192, 0
        %253 = vmatprep.subr.bf16.mxu0 0
        %254 = vmatpush1.bf16.msra.mxu0 0
        %255 = vmatprep.subr.bf16.mxu0 0
        %256 = vmatpush1.bf16.msra.mxu0 0
        %257 = vmatprep.subr.bf16.mxu0 0
        %258 = vmatpush1.bf16.msra.mxu0 0
        %259 = vmatprep.subr.bf16.mxu0 0
        %260 = vmatpush1.bf16.msra.mxu0 0
        %261 = vmatprep.subr.bf16.mxu0 0
        %262 = vmatpush1.bf16.msra.mxu0 0
        %263 = vmatprep.subr.bf16.mxu0 0
        %264 = vmatpush1.bf16.msra.mxu0 0
        %265 = vmatprep.subr.bf16.mxu0 0
        %266 = vmatpush1.bf16.msra.mxu0 0
        %267 = vmatprep.subr.bf16.mxu0 0
        %268 = vmatpush1.bf16.msra.mxu0 %v251
        %269 = vmatprep.subr.bf16.mxu0 0
        %270 = vmatpush2.bf16.msra.mxu0 0
        %271 = vmatprep.subr.bf16.mxu0 0
        %272 = vmatpush2.bf16.msra.mxu0 0
        %273 = vmatprep.subr.bf16.mxu0 0
        %274 = vmatpush2.bf16.msra.mxu0 0
        %275 = vmatprep.subr.bf16.mxu0 0
        %276 = vmatpush2.bf16.msra.mxu0 0
        %277 = vmatprep.subr.bf16.mxu0 0
        %278 = vmatpush2.bf16.msra.mxu0 0
        %279 = vmatprep.subr.bf16.mxu0 0
        %280 = vmatpush2.bf16.msra.mxu0 0
        %281 = vmatprep.subr.bf16.mxu0 0
        %282 = vmatpush2.bf16.msra.mxu0 0
        %283 = vmatprep.subr.bf16.mxu0 0
        %284 = vmatpush2.bf16.msra.mxu0 0
        %285 = vmatprep.mubr.bf16.mxu0 0
        %286 = vmatmul.mubr.bf16.gmra.mxu0 %v248
        %v287 = vpop.f32.mrf.mxu0
        %v288 = vadd.f32 %v242, %v287
        %v289 = vpop.f32.mrf.mxu0
        %v290 = vpop.f32.mrf.mxu0
        %v291 = vpop.f32.mrf.mxu0
        %292 = vdwg.mxu0
        %s293 = scalar_lea.vmem %s1, 8
        %v294 = vld [vmem:[%s293] sm:$0xf]
        %295 = vrot.lane.b32.xlu0 %v192, 126
        %v296 = vpop.permute.xlu0 %295
        %v298 = vsel %vm199, %v294, 0
        %v301 = vsel %vm203, %v296, 0
        %303 = vmatprep.subr.bf16.mxu0 0
        %304 = vmatpush1.bf16.msra.mxu0 0
        %305 = vmatprep.subr.bf16.mxu0 0
        %306 = vmatpush1.bf16.msra.mxu0 0
        %307 = vmatprep.subr.bf16.mxu0 0
        %308 = vmatpush1.bf16.msra.mxu0 0
        %309 = vmatprep.subr.bf16.mxu0 0
        %310 = vmatpush1.bf16.msra.mxu0 0
        %311 = vmatprep.subr.bf16.mxu0 0
        %312 = vmatpush1.bf16.msra.mxu0 0
        %313 = vmatprep.subr.bf16.mxu0 0
        %314 = vmatpush1.bf16.msra.mxu0 0
        %315 = vmatprep.subr.bf16.mxu0 0
        %316 = vmatpush1.bf16.msra.mxu0 0
        %317 = vmatprep.subr.bf16.mxu0 0
        %318 = vmatpush1.bf16.msra.mxu0 %v301
        %319 = vmatprep.subr.bf16.mxu0 0
        %320 = vmatpush2.bf16.msra.mxu0 0
        %321 = vmatprep.subr.bf16.mxu0 0
        %322 = vmatpush2.bf16.msra.mxu0 0
        %323 = vmatprep.subr.bf16.mxu0 0
        %324 = vmatpush2.bf16.msra.mxu0 0
        %325 = vmatprep.subr.bf16.mxu0 0
        %326 = vmatpush2.bf16.msra.mxu0 0
        %327 = vmatprep.subr.bf16.mxu0 0
        %328 = vmatpush2.bf16.msra.mxu0 0
        %329 = vmatprep.subr.bf16.mxu0 0
        %330 = vmatpush2.bf16.msra.mxu0 0
        %331 = vmatprep.subr.bf16.mxu0 0
        %332 = vmatpush2.bf16.msra.mxu0 0
        %333 = vmatprep.subr.bf16.mxu0 0
        %334 = vmatpush2.bf16.msra.mxu0 0
        %335 = vmatprep.mubr.bf16.mxu0 0
        %336 = vmatmul.mubr.bf16.gmra.mxu0 %v298
        %v337 = vpop.f32.mrf.mxu0
        %v338 = vadd.f32 0.0, %v337
        %v339 = vpop.f32.mrf.mxu0
        %v340 = vpop.f32.mrf.mxu0
        %v341 = vpop.f32.mrf.mxu0
        %342 = vdwg.mxu0
        %v343 = vadd.f32 %v288, %v338
        // Predicated region
        $region37: #{conv1x3_forward.1} parent=31 // pred_check
          %p344 = pneg %p182
        $region38: #{conv1x3_forward.1} parent=31 // pred_check_branch
          %346 = sbr.rel (%p344) target = $region40
        $region39: #{conv1x3_forward.1} parent=31 // pred_region
          %v347 = vld [vmem:[#allocation2] sm:$0xff]
          %vm348 = vcmask 261120
          %v349 = vsel %vm348, %v343, 0.0
          %350 = vadd.xlane.f32.xlu0 %v349
          %v351 = vpop.xlane.xlu0 %350
          %v352 = vadd.f32 %v347, %v351
          %vm353 = vcmask 7168
          %354 = vst.msk [vmem:[#allocation2] sm:$0xff] %vm353, %v352
          %v355 = vld [vmem:[#allocation3] sm:$0xff]
          %v356 = vmul.f32 %v343, %v343
          %v357 = vsel %vm348, %v356, 0.0
          %358 = vadd.xlane.f32.xlu0 %v357
          %v359 = vpop.xlane.xlu0 %358
          %v360 = vadd.f32 %v355, %v359
          %361 = vst.msk [vmem:[#allocation3] sm:$0xff] %vm353, %v360
        $region40: #{conv1x3_forward.1} parent=31 // pred_fallthru
          _
        %p362 = scmp.eq.s32.totalorder %s21, 1
        // Predicated region
        $region41: #{conv1x3_forward.1} parent=31 // pred_check
          %p363 = pneg %p362
        $region42: #{conv1x3_forward.1} parent=31 // pred_check_branch
          %365 = sbr.rel (%p363) target = $region44
        $region43: #{conv1x3_forward.1} parent=31 // pred_region
          %v366 = vld [vmem:[#allocation2] sm:$0xff]
          %v367 = vmul.f32 %v366, 0.015625
          %v368 = vld [vmem:[#allocation3] sm:$0xff]
          %v369 = vmul.f32 %v368, 0.015625
          %v370 = vmul.f32 %v367, %v367
          %v371 = vsub.f32 %v369, %v370
          %v372 = vld [vmem:[%s2] sm:$0xff]
          %v373 = vadd.f32 %v371, 1e-05
          %v374 = vrsqrt.pop %v373
          %v375 = vmul.f32 %v374, %v372
          %377 = vset.pattern.permute.xlu0 0
          %378 = vperm.xlu0 %377, %v367
          %v379 = vpop.permute.xlu0 %378
          %v381 = vsub.f32 %v343, %v379
          %383 = vset.pattern.permute.xlu0 0
          %384 = vperm.xlu0 %383, %v375
          %v385 = vpop.permute.xlu0 %384
          %v387 = vmul.f32 %v381, %v385
          %389 = vset.pattern.permute.xlu0 1
          %390 = vperm.xlu0 %389, %v372
          %v391 = vpop.permute.xlu0 %390
          %v393 = vadd.f32 %v387, %v391
          %v394 = vmax.f32 %v393, 0.0
          %396 = vrot.lane.b32.xlu0 %v394, 124
          %v397 = vpop.permute.xlu0 %396
          %399 = vrot.lane.b32.xlu0 %v394, 120
          %v400 = vpop.permute.xlu0 %399
          %402 = vrot.lane.b32.xlu0 %v394, 116
          %v403 = vpop.permute.xlu0 %402
          %405 = vrot.lane.b32.xlu0 %v394, 112
          %v406 = vpop.permute.xlu0 %405
          %408 = vrot.lane.b32.xlu0 %v394, 108
          %v409 = vpop.permute.xlu0 %408
          %411 = vrot.lane.b32.xlu0 %v394, 104
          %v412 = vpop.permute.xlu0 %411
          %414 = vrot.lane.b32.xlu0 %v394, 100
          %v415 = vpop.permute.xlu0 %414
          %v417 = vcombine.low %v394, %v400
          %v418 = vcombine.high %v394, %v400
          %v420 = vunpack.c.l.s4 1983009808
          %v421 = vunpack.c.0.s8 %v420
          %v422 = vlaneseq
          %v423 = vshrl.u32 %v422, 7
          %v424 = vsub.s32 %v421, %v423
          %v425 = vrot.slane %v417, %v424
          %v427 = vunpack.c.l.s4 1983009808
          %v428 = vunpack.c.0.s8 %v427
          %v429 = vlaneseq
          %v430 = vshrl.u32 %v429, 7
          %v431 = vsub.s32 %v428, %v430
          %v432 = vrot.slane %v418, %v431
          %v433 = vcombine.low %v397, %v403
          %v434 = vcombine.high %v397, %v403
          %v436 = vunpack.c.l.s4 1983009808
          %v437 = vunpack.c.0.s8 %v436
          %v438 = vlaneseq
          %v439 = vshrl.u32 %v438, 7
          %v440 = vsub.s32 %v437, %v439
          %v441 = vrot.slane %v433, %v440
          %v443 = vunpack.c.l.s4 1983009808
          %v444 = vunpack.c.0.s8 %v443
          %v445 = vlaneseq
          %v446 = vshrl.u32 %v445, 7
          %v447 = vsub.s32 %v444, %v446
          %v448 = vrot.slane %v434, %v447
          %v449 = vcombine.low %v406, %v412
          %v450 = vcombine.high %v406, %v412
          %v452 = vunpack.c.l.s4 1983009808
          %v453 = vunpack.c.0.s8 %v452
          %v454 = vlaneseq
          %v455 = vshrl.u32 %v454, 7
          %v456 = vsub.s32 %v453, %v455
          %v457 = vrot.slane %v449, %v456
          %v459 = vunpack.c.l.s4 1983009808
          %v460 = vunpack.c.0.s8 %v459
          %v461 = vlaneseq
          %v462 = vshrl.u32 %v461, 7
          %v463 = vsub.s32 %v460, %v462
          %v464 = vrot.slane %v450, %v463
          %v465 = vcombine.low %v409, %v415
          %v466 = vcombine.high %v409, %v415
          %v468 = vunpack.c.l.s4 1983009808
          %v469 = vunpack.c.0.s8 %v468
          %v470 = vlaneseq
          %v471 = vshrl.u32 %v470, 7
          %v472 = vsub.s32 %v469, %v471
          %v473 = vrot.slane %v465, %v472
          %v475 = vunpack.c.l.s4 1983009808
          %v476 = vunpack.c.0.s8 %v475
          %v477 = vlaneseq
          %v478 = vshrl.u32 %v477, 7
          %v479 = vsub.s32 %v476, %v478
          %v480 = vrot.slane %v466, %v479
          %v481 = vcombine.low %v425, %v441
          %v482 = vcombine.high %v425, %v441
          %v484 = vunpack.c.l.s4 1934713408
          %v485 = vunpack.c.0.s8 %v484
          %v486 = vlaneseq
          %v487 = vshrl.u32 %v486, 7
          %v488 = vsub.s32 %v485, %v487
          %v489 = vrot.slane %v481, %v488
          %v491 = vunpack.c.l.s4 1934713408
          %v492 = vunpack.c.0.s8 %v491
          %v493 = vlaneseq
          %v494 = vshrl.u32 %v493, 7
          %v495 = vsub.s32 %v492, %v494
          %v496 = vrot.slane %v482, %v495
          %v497 = vcombine.low %v432, %v448
          %v498 = vcombine.high %v432, %v448
          %v500 = vunpack.c.l.s4 1934713408
          %v501 = vunpack.c.0.s8 %v500
          %v502 = vlaneseq
          %v503 = vshrl.u32 %v502, 7
          %v504 = vsub.s32 %v501, %v503
          %v505 = vrot.slane %v497, %v504
          %v507 = vunpack.c.l.s4 1934713408
          %v508 = vunpack.c.0.s8 %v507
          %v509 = vlaneseq
          %v510 = vshrl.u32 %v509, 7
          %v511 = vsub.s32 %v508, %v510
          %v512 = vrot.slane %v498, %v511
          %v513 = vcombine.low %v457, %v473
          %v514 = vcombine.high %v457, %v473
          %v516 = vunpack.c.l.s4 1934713408
          %v517 = vunpack.c.0.s8 %v516
          %v518 = vlaneseq
          %v519 = vshrl.u32 %v518, 7
          %v520 = vsub.s32 %v517, %v519
          %v521 = vrot.slane %v513, %v520
          %v523 = vunpack.c.l.s4 1934713408
          %v524 = vunpack.c.0.s8 %v523
          %v525 = vlaneseq
          %v526 = vshrl.u32 %v525, 7
          %v527 = vsub.s32 %v524, %v526
          %v528 = vrot.slane %v514, %v527
          %v529 = vcombine.low %v464, %v480
          %v530 = vcombine.high %v464, %v480
          %v532 = vunpack.c.l.s4 1934713408
          %v533 = vunpack.c.0.s8 %v532
          %v534 = vlaneseq
          %v535 = vshrl.u32 %v534, 7
          %v536 = vsub.s32 %v533, %v535
          %v537 = vrot.slane %v529, %v536
          %v539 = vunpack.c.l.s4 1934713408
          %v540 = vunpack.c.0.s8 %v539
          %v541 = vlaneseq
          %v542 = vshrl.u32 %v541, 7
          %v543 = vsub.s32 %v540, %v542
          %v544 = vrot.slane %v530, %v543
          %v545 = vcombine.low %v489, %v521
          %v546 = vcombine.high %v489, %v521
          %v547 = vcombine.low %v496, %v528
          %v548 = vcombine.high %v496, %v528
          %v549 = vcombine.low %v505, %v537
          %v550 = vcombine.high %v505, %v537
          %v551 = vcombine.low %v512, %v544
          %v552 = vcombine.high %v512, %v544
          %v553 = vsel %vm199, %v545, -inf
          %554 = vmax.xlane.f32.xlu0 %v553
          %v555 = vpop.xlane.xlu0 %554
          %v556 = vsel %vm199, %v546, -inf
          %557 = vmax.xlane.f32.xlu0 %v556
          %v558 = vpop.xlane.xlu0 %557
          %v559 = vsel %vm199, %v547, -inf
          %560 = vmax.xlane.f32.xlu0 %v559
          %v561 = vpop.xlane.xlu0 %560
          %v562 = vsel %vm199, %v548, -inf
          %563 = vmax.xlane.f32.xlu0 %v562
          %v564 = vpop.xlane.xlu0 %563
          %v565 = vsel %vm199, %v549, -inf
          %566 = vmax.xlane.f32.xlu0 %v565
          %v567 = vpop.xlane.xlu0 %566
          %v568 = vsel %vm199, %v550, -inf
          %569 = vmax.xlane.f32.xlu0 %v568
          %v570 = vpop.xlane.xlu0 %569
          %v571 = vsel %vm199, %v551, -inf
          %572 = vmax.xlane.f32.xlu0 %v571
          %v573 = vpop.xlane.xlu0 %572
          %v574 = vsel %vm199, %v552, -inf
          %575 = vmax.xlane.f32.xlu0 %v574
          %v576 = vpop.xlane.xlu0 %575
          %v585 = vlaneseq
          %v586 = vand.u32 %v585, 127
          %v587 = vlaneseq
          %v588 = vshrl.u32 %v587, 7
          %v589 = vsub.s32 %v586, %v588
          %v590 = vrot.slane %v555, %v589
          %v591 = vlaneseq
          %v592 = vshrl.u32 %v591, 7
          %v593 = vsub.s32 %v586, %v592
          %v594 = vrot.slane %v558, %v593
          %v595 = vlaneseq
          %v596 = vshrl.u32 %v595, 7
          %v597 = vsub.s32 %v586, %v596
          %v598 = vrot.slane %v561, %v597
          %v599 = vlaneseq
          %v600 = vshrl.u32 %v599, 7
          %v601 = vsub.s32 %v586, %v600
          %v602 = vrot.slane %v564, %v601
          %v603 = vlaneseq
          %v604 = vshrl.u32 %v603, 7
          %v605 = vsub.s32 %v586, %v604
          %v606 = vrot.slane %v567, %v605
          %v607 = vlaneseq
          %v608 = vshrl.u32 %v607, 7
          %v609 = vsub.s32 %v586, %v608
          %v610 = vrot.slane %v570, %v609
          %v611 = vlaneseq
          %v612 = vshrl.u32 %v611, 7
          %v613 = vsub.s32 %v586, %v612
          %v614 = vrot.slane %v573, %v613
          %v615 = vlaneseq
          %v616 = vshrl.u32 %v615, 7
          %v617 = vsub.s32 %v586, %v616
          %v618 = vrot.slane %v576, %v617
          %vm619 = vcmask 1041409
          %v620 = vsel %vm619, %v594, %v590
          %vm621 = vcmask 1042434
          %v622 = vsel %vm621, %v598, %v620
          %vm623 = vcmask 1043459
          %v624 = vsel %vm623, %v602, %v622
          %vm625 = vcmask 1044484
          %v626 = vsel %vm625, %v606, %v624
          %vm627 = vcmask 1045509
          %v628 = vsel %vm627, %v610, %v626
          %vm629 = vcmask 1046534
          %v630 = vsel %vm629, %v614, %v628
          %vm631 = vcmask 1047559
          %v632 = vsel %vm631, %v618, %v630
          %vm634 = vcmask 64512
          %635 = vst.msk [vmem:[%s175] sm:$0xff] %vm634, %v632
        $region44: #{conv1x3_forward.1} parent=31 // pred_fallthru
          _
        %s636 = sand.u32 %s107, 1
        %s637 = scalar_lea.sflag [#allocation5], %s636
        %s638 = sand.u32 %s107, 1
        %s639 = smul.addr %s638, 8
        %s640 = scalar_lea.vmem [#allocation4], %s639
        // Predicated region
        $region45: #{conv1x3_forward.1} parent=31 // pred_check
          %p641 = pneg %p117
        $region46: #{conv1x3_forward.1} parent=31 // pred_check_branch
          %643 = sbr.rel (%p641) target = $region48
        $region47: #{conv1x3_forward.1} parent=31 // pred_region
          %s644 = smul.u32 %s22, %s21
          %s646 = ssub.s32 128, 128
          %647 = vsyncadd %s637, %s646
          %s648 = smul.addr %s644, 128
          %s649 = scalar_lea.hbm %s3, %s648
          %s651 = sshll.u32 %s640, 4
          %s652 = int_to_ptr.vmem [resolvable:$true] %s651
          %654 = dma.vmem_to_hbm [thread:$0]  %s652, 128, %s649, %s637
        $region48: #{conv1x3_forward.1} parent=31 // pred_fallthru
          _
      $region32: #{conv1x3_forward.1} parent=5 // pred_fallthru
        _
      %p655 = scmp.le.s32.totalorder 2, %s12
      // Predicated region
      $region49: #{conv1x3_forward.1} parent=5 // pred_check
        %p656 = pneg %p655
      $region50: #{conv1x3_forward.1} parent=5 // pred_check_branch
        %658 = sbr.rel (%p656) target = $region52
      $region51: #{conv1x3_forward.1} parent=5 // pred_region
        %s659 = ssub.s32 %s12, 2
        // Predicated region
        $region53: #{conv1x3_forward.1} parent=51 // pred_check
          %p660 = pneg %p123
        $region54: #{conv1x3_forward.1} parent=51 // pred_check_branch
          %662 = sbr.rel (%p660) target = $region56
        $region55: #{conv1x3_forward.1} parent=51 // pred_region
          %s663 = sand.u32 %s108, 1
          %s664 = scalar_lea.sflag [#allocation5], %s663
          %s665 = sand.u32 %s108, 1
          %s666 = smul.addr %s665, 8
          %s667 = scalar_lea.vmem [#allocation4], %s666
          %668 = dma.done %s664, 128
        $region56: #{conv1x3_forward.1} parent=51 // pred_fallthru
          _
      $region52: #{conv1x3_forward.1} parent=5 // pred_fallthru
        _
    $region6: #{conv1x3_forward.1} parent=1 // loop_footer
      %s16 = sadd.s32 1, %s12
    $region7: #{conv1x3_forward.1} parent=1 // loop_footer_branch
      %11 = sbr.rel target = $region3
    $region8: #{conv1x3_forward.1} parent=1 // loop_exit
      _
    %669 = vsyncpa [#allocation5], 1
    %s670 = scalar_lea.sflag [#allocation5], 1
    %671 = vsyncpa %s670, 1

</llo_original>
